<compile_context>
chip_gen: v6e
topology: v6e:2x2x1
jax: 0.10.0
libtpu: 0.0.40
codegen_flags: <defaults>
</compile_context>

<pallas_src>
import functools

import jax
import jax.numpy as jnp
from jax.experimental import pallas as pl
from jax.experimental.pallas import tpu as pltpu

EPS = 1e-5
LANE = 128


def _round_up(v, m):
    return (v + m - 1) // m * m


def _pad_to(a, shape):
    pads = [(0, s - d) for d, s in zip(a.shape, shape)]
    return jnp.pad(a, pads)


def _fused_mlp_kernel(x_ref, w1_ref, gb1_ref, w2_ref, gb2_ref, w3_ref, gb3_ref,
                      o_ref, *, n):
    """Three fused Linear(no-bias) + BN(train) (+ReLU) layers, all in VMEM."""
    inv_n = 1.0 / float(n)

    def layer(x_bf16, w_ref, gb_ref, relu):
        # bf16 MXU inputs, f32 accumulation.
        y = jnp.dot(x_bf16, w_ref[...], preferred_element_type=jnp.float32)  # [N, D]

        # One-pass BN stats (f32 sums, biased variance, clamped >= 0).
        s = jnp.sum(y, axis=0, keepdims=True)                  # [1, D]
        sq = jnp.sum(y * y, axis=0, keepdims=True)             # [1, D]
        mean = s * inv_n
        var = jnp.maximum(sq * inv_n - mean * mean, 0.0)

        # Fold gamma / rsqrt / mean / beta into one per-feature scale & shift.
        gamma = gb_ref[0:1, :]
        beta = gb_ref[1:2, :]
        scale = gamma * jax.lax.rsqrt(var + EPS)                # [1, D]
        shift = beta - mean * scale                             # [1, D]
        # Padded feature columns: y==0, gamma==beta==0 -> scale=shift=0 -> y==0.
        y = y * scale + shift
        if relu:
            y = jnp.maximum(y, 0.0)
        return y

    h1 = layer(x_ref[...], w1_ref, gb1_ref, True).astype(jnp.bfloat16)
    h2 = layer(h1, w2_ref, gb2_ref, True).astype(jnp.bfloat16)
    o_ref[...] = layer(h2, w3_ref, gb3_ref, False).astype(o_ref.dtype)


def prepare_params(params):
    """One-time prep: pad feature dims to lane multiples, cast weights to
    bf16, pack gamma/beta into a single [2, D] array per layer.
    (Linear biases b1/b2/b3 are intentionally unused: training-mode BN
    subtracts the batch mean, which cancels them exactly.)"""
    in_dim, hid_dim = params["w1"].shape
    out_dim = params["w3"].shape[1]
    in_p = _round_up(in_dim, LANE)
    hid_p = _round_up(hid_dim, LANE)
    out_p = _round_up(out_dim, LANE)

    def pack_gb(g, be, dp):
        return jnp.concatenate([_pad_to(g, (1, dp)), _pad_to(be, (1, dp))], axis=0)

    return {
        "w1": _pad_to(params["w1"], (in_p, hid_p)).astype(jnp.bfloat16),
        "w2": _pad_to(params["w2"], (hid_p, hid_p)).astype(jnp.bfloat16),
        "w3": _pad_to(params["w3"], (hid_p, out_p)).astype(jnp.bfloat16),
        "gb1": pack_gb(params["g1"], params["be1"], hid_p),
        "gb2": pack_gb(params["g2"], params["be2"], hid_p),
        "gb3": pack_gb(params["g3"], params["be3"], out_p),
        "dims": (in_dim, hid_dim, out_dim, in_p, hid_p, out_p),
    }


def projection_mlp(x, prepped):
    """x: [N, in_dim] float32. prepped: output of prepare_params."""
    in_dim, hid_dim, out_dim, in_p, hid_p, out_p = prepped["dims"]
    n = x.shape[0]
    assert x.shape[1] == in_dim

    # Pad + cast activations to bf16 once, outside the kernel.
    xp = _pad_to(x, (n, in_p)).astype(jnp.bfloat16)

    # Estimate the resident VMEM footprint and set the scoped limit with
    # headroom (everything lives in VMEM: x, weights, gamma/beta, hidden
    # activations, output).
    x_b = n * in_p * 2
    w_b = (in_p * hid_p + hid_p * hid_p + hid_p * out_p) * 2
    gb_b = 8 * (hid_p * 2 + out_p) * 4                     # [2,D] padded to 8 sublanes
    act_b = n * hid_p * (4 + 2) * 2 + n * out_p * 4 * 2    # f32 + bf16 hiddens, f32 out
    need = x_b + w_b + gb_b + act_b
    vmem_limit = int(min(max(2 * need, 32 << 20), 100 << 20))

    vmem_spec = pl.BlockSpec(memory_space=pltpu.MemorySpace.VMEM)
    out = pl.pallas_call(
        functools.partial(_fused_mlp_kernel, n=n),
        out_shape=jax.ShapeDtypeStruct((n, out_p), jnp.float32),
        in_specs=[vmem_spec] * 7,
        out_specs=vmem_spec,
        compiler_params=pltpu.CompilerParams(vmem_limit_bytes=vmem_limit),
    )(xp, prepped["w1"], prepped["gb1"], prepped["w2"], prepped["gb2"],
      prepped["w3"], prepped["gb3"])
    return out[:, :out_dim]


def init_params(key, in_dim, hid_dim, out_dim):
    """Synthetic init matching nn.Linear / nn.BatchNorm1d shapes (W pre-transposed)."""
    ks = jax.random.split(key, 6)

    def linear(kw, kb, din, dout):
        bound = 1.0 / jnp.sqrt(din)
        w = jax.random.uniform(kw, (din, dout), jnp.float32, -bound, bound)
        b = jax.random.uniform(kb, (1, dout), jnp.float32, -bound, bound)
        return w, b

    w1, b1 = linear(ks[0], ks[1], in_dim, hid_dim)
    w2, b2 = linear(ks[2], ks[3], hid_dim, hid_dim)
    w3, b3 = linear(ks[4], ks[5], hid_dim, out_dim)
    ones, zeros = jnp.ones, jnp.zeros
    return {
        "w1": w1, "b1": b1, "g1": ones((1, hid_dim), jnp.float32), "be1": zeros((1, hid_dim), jnp.float32),
        "w2": w2, "b2": b2, "g2": ones((1, hid_dim), jnp.float32), "be2": zeros((1, hid_dim), jnp.float32),
        "w3": w3, "b3": b3, "g3": ones((1, out_dim), jnp.float32), "be3": zeros((1, out_dim), jnp.float32),
    }


def projection_mlp_ref(x, p):
    """Pure-JAX f32 reference (includes the Linear biases; BN cancels them)."""
    def lbn(x, w, b, g, be, relu):
        y = x @ w + b
        m = y.mean(0, keepdims=True)
        v = ((y - m) ** 2).mean(0, keepdims=True)
        y = (y - m) / jnp.sqrt(v + EPS) * g + be
        return jnp.maximum(y, 0.0) if relu else y

    h = lbn(x, p["w1"], p["b1"], p["g1"], p["be1"], True)
    h = lbn(h, p["w2"], p["b2"], p["g2"], p["be2"], True)
    return lbn(h, p["w3"], p["b3"], p["g3"], p["be3"], False)


if __name__ == "__main__":
    key = jax.random.PRNGKey(0)
    k_x, k_p = jax.random.split(key)

    batch, in_dim, hid_dim, out_dim = 8, 32, 64, 32
    x = jax.random.normal(k_x, (batch, in_dim), jnp.float32)
    params = init_params(k_p, in_dim, hid_dim, out_dim)
    prepped = prepare_params(params)   # one-time pad + bf16 cast

    out = jax.block_until_ready(projection_mlp(x, prepped))
    ref = projection_mlp_ref(x, params)

    assert out.shape == (batch, out_dim)
    # bf16 matmul inputs / bf16 hidden activations with f32 accumulation ->
    # looser tolerance than pure f32.
    max_err = float(jnp.max(jnp.abs(out - ref)))
    assert jnp.allclose(out, ref, atol=5e-2, rtol=5e-2), f"mismatch vs reference (max abs err {max_err})"
    # TODO(synk): BatchNorm1d running_mean/running_var (eval-mode stats) are not
    # tracked; this implements the training-mode forward only.
    print("KERNEL_OK")
</pallas_src>

<mosaic_0001>
module attributes {stable_mosaic.version = 11 : i64} {
  func.func @_fused_mlp_kernel(%arg0: memref<8x128xbf16, #tpu.memory_space<vmem>>, %arg1: memref<128x128xbf16, #tpu.memory_space<vmem>>, %arg2: memref<2x128xf32, #tpu.memory_space<vmem>>, %arg3: memref<128x128xbf16, #tpu.memory_space<vmem>>, %arg4: memref<2x128xf32, #tpu.memory_space<vmem>>, %arg5: memref<128x128xbf16, #tpu.memory_space<vmem>>, %arg6: memref<2x128xf32, #tpu.memory_space<vmem>>, %arg7: memref<8x128xf32, #tpu.memory_space<vmem>>) attributes {dimension_semantics = [], scalar_prefetch = 0 : i64, scratch_operands = 0 : i64, tpu.core_type = #tpu.core_type<tc>} {
    %c0 = arith.constant 0 : index
    %c0_0 = arith.constant 0 : index
    %0 = vector.load %arg0[%c0, %c0_0] : memref<8x128xbf16, #tpu.memory_space<vmem>>, vector<8x128xbf16>
    %c0_1 = arith.constant 0 : index
    %c0_2 = arith.constant 0 : index
    %1 = vector.load %arg1[%c0_1, %c0_2] : memref<128x128xbf16, #tpu.memory_space<vmem>>, vector<128x128xbf16>
    %cst = arith.constant dense<0.000000e+00> : vector<8x128xf32>
    %2 = tpu.matmul %0, %1, %cst {dimension_numbers = #tpu.dot_dimension_numbers<[1], [0], [0], [1], [0, 0, 1, 1], [], []>} : vector<8x128xbf16>, vector<128x128xbf16>, vector<8x128xf32> -> vector<8x128xf32>
    %cst_3 = arith.constant dense<0.000000e+00> : vector<128xf32>
    %3 = vector.multi_reduction <add>, %2, %cst_3 [0] : vector<8x128xf32> to vector<128xf32>
    %4 = vector.shape_cast %3 : vector<128xf32> to vector<1x128xf32>
    %5 = arith.mulf %2, %2 : vector<8x128xf32>
    %cst_4 = arith.constant dense<0.000000e+00> : vector<128xf32>
    %6 = vector.multi_reduction <add>, %5, %cst_4 [0] : vector<8x128xf32> to vector<128xf32>
    %7 = vector.shape_cast %6 : vector<128xf32> to vector<1x128xf32>
    %cst_5 = arith.constant 1.250000e-01 : f32
    %8 = vector.broadcast %cst_5 : f32 to vector<1x128xf32>
    %9 = arith.mulf %4, %8 : vector<1x128xf32>
    %cst_6 = arith.constant 1.250000e-01 : f32
    %10 = vector.broadcast %cst_6 : f32 to vector<1x128xf32>
    %11 = arith.mulf %7, %10 : vector<1x128xf32>
    %12 = arith.mulf %9, %9 : vector<1x128xf32>
    %13 = arith.subf %11, %12 : vector<1x128xf32>
    %cst_7 = arith.constant 0.000000e+00 : f32
    %14 = vector.broadcast %cst_7 : f32 to vector<1x128xf32>
    %15 = arith.maximumf %13, %14 : vector<1x128xf32>
    %c0_8 = arith.constant 0 : index
    %c0_9 = arith.constant 0 : index
    %16 = vector.load %arg2[%c0_8, %c0_9] : memref<2x128xf32, #tpu.memory_space<vmem>>, vector<1x128xf32>
    %c1 = arith.constant 1 : index
    %c0_10 = arith.constant 0 : index
    %17 = vector.load %arg2[%c1, %c0_10] : memref<2x128xf32, #tpu.memory_space<vmem>>, vector<1x128xf32>
    %cst_11 = arith.constant 9.99999974E-6 : f32
    %18 = vector.broadcast %cst_11 : f32 to vector<1x128xf32>
    %19 = arith.addf %15, %18 : vector<1x128xf32>
    %20 = math.rsqrt %19 : vector<1x128xf32>
    %21 = arith.mulf %16, %20 : vector<1x128xf32>
    %22 = arith.mulf %9, %21 : vector<1x128xf32>
    %23 = arith.subf %17, %22 : vector<1x128xf32>
    %24 = vector.broadcast %21 : vector<1x128xf32> to vector<8x128xf32>
    %25 = arith.mulf %2, %24 : vector<8x128xf32>
    %26 = vector.broadcast %23 : vector<1x128xf32> to vector<8x128xf32>
    %27 = arith.addf %25, %26 : vector<8x128xf32>
    %cst_12 = arith.constant 0.000000e+00 : f32
    %28 = vector.broadcast %cst_12 : f32 to vector<8x128xf32>
    %29 = arith.maximumf %27, %28 : vector<8x128xf32>
    %30 = arith.truncf %29 : vector<8x128xf32> to vector<8x128xbf16>
    %c0_13 = arith.constant 0 : index
    %c0_14 = arith.constant 0 : index
    %31 = vector.load %arg3[%c0_13, %c0_14] : memref<128x128xbf16, #tpu.memory_space<vmem>>, vector<128x128xbf16>
    %cst_15 = arith.constant dense<0.000000e+00> : vector<8x128xf32>
    %32 = tpu.matmul %30, %31, %cst_15 {dimension_numbers = #tpu.dot_dimension_numbers<[1], [0], [0], [1], [0, 0, 1, 1], [], []>} : vector<8x128xbf16>, vector<128x128xbf16>, vector<8x128xf32> -> vector<8x128xf32>
    %cst_16 = arith.constant dense<0.000000e+00> : vector<128xf32>
    %33 = vector.multi_reduction <add>, %32, %cst_16 [0] : vector<8x128xf32> to vector<128xf32>
    %34 = vector.shape_cast %33 : vector<128xf32> to vector<1x128xf32>
    %35 = arith.mulf %32, %32 : vector<8x128xf32>
    %cst_17 = arith.constant dense<0.000000e+00> : vector<128xf32>
    %36 = vector.multi_reduction <add>, %35, %cst_17 [0] : vector<8x128xf32> to vector<128xf32>
    %37 = vector.shape_cast %36 : vector<128xf32> to vector<1x128xf32>
    %cst_18 = arith.constant 1.250000e-01 : f32
    %38 = vector.broadcast %cst_18 : f32 to vector<1x128xf32>
    %39 = arith.mulf %34, %38 : vector<1x128xf32>
    %cst_19 = arith.constant 1.250000e-01 : f32
    %40 = vector.broadcast %cst_19 : f32 to vector<1x128xf32>
    %41 = arith.mulf %37, %40 : vector<1x128xf32>
    %42 = arith.mulf %39, %39 : vector<1x128xf32>
    %43 = arith.subf %41, %42 : vector<1x128xf32>
    %cst_20 = arith.constant 0.000000e+00 : f32
    %44 = vector.broadcast %cst_20 : f32 to vector<1x128xf32>
    %45 = arith.maximumf %43, %44 : vector<1x128xf32>
    %c0_21 = arith.constant 0 : index
    %c0_22 = arith.constant 0 : index
    %46 = vector.load %arg4[%c0_21, %c0_22] : memref<2x128xf32, #tpu.memory_space<vmem>>, vector<1x128xf32>
    %c1_23 = arith.constant 1 : index
    %c0_24 = arith.constant 0 : index
    %47 = vector.load %arg4[%c1_23, %c0_24] : memref<2x128xf32, #tpu.memory_space<vmem>>, vector<1x128xf32>
    %cst_25 = arith.constant 9.99999974E-6 : f32
    %48 = vector.broadcast %cst_25 : f32 to vector<1x128xf32>
    %49 = arith.addf %45, %48 : vector<1x128xf32>
    %50 = math.rsqrt %49 : vector<1x128xf32>
    %51 = arith.mulf %46, %50 : vector<1x128xf32>
    %52 = arith.mulf %39, %51 : vector<1x128xf32>
    %53 = arith.subf %47, %52 : vector<1x128xf32>
    %54 = vector.broadcast %51 : vector<1x128xf32> to vector<8x128xf32>
    %55 = arith.mulf %32, %54 : vector<8x128xf32>
    %56 = vector.broadcast %53 : vector<1x128xf32> to vector<8x128xf32>
    %57 = arith.addf %55, %56 : vector<8x128xf32>
    %cst_26 = arith.constant 0.000000e+00 : f32
    %58 = vector.broadcast %cst_26 : f32 to vector<8x128xf32>
    %59 = arith.maximumf %57, %58 : vector<8x128xf32>
    %60 = arith.truncf %59 : vector<8x128xf32> to vector<8x128xbf16>
    %c0_27 = arith.constant 0 : index
    %c0_28 = arith.constant 0 : index
    %61 = vector.load %arg5[%c0_27, %c0_28] : memref<128x128xbf16, #tpu.memory_space<vmem>>, vector<128x128xbf16>
    %cst_29 = arith.constant dense<0.000000e+00> : vector<8x128xf32>
    %62 = tpu.matmul %60, %61, %cst_29 {dimension_numbers = #tpu.dot_dimension_numbers<[1], [0], [0], [1], [0, 0, 1, 1], [], []>} : vector<8x128xbf16>, vector<128x128xbf16>, vector<8x128xf32> -> vector<8x128xf32>
    %cst_30 = arith.constant dense<0.000000e+00> : vector<128xf32>
    %63 = vector.multi_reduction <add>, %62, %cst_30 [0] : vector<8x128xf32> to vector<128xf32>
    %64 = vector.shape_cast %63 : vector<128xf32> to vector<1x128xf32>
    %65 = arith.mulf %62, %62 : vector<8x128xf32>
    %cst_31 = arith.constant dense<0.000000e+00> : vector<128xf32>
    %66 = vector.multi_reduction <add>, %65, %cst_31 [0] : vector<8x128xf32> to vector<128xf32>
    %67 = vector.shape_cast %66 : vector<128xf32> to vector<1x128xf32>
    %cst_32 = arith.constant 1.250000e-01 : f32
    %68 = vector.broadcast %cst_32 : f32 to vector<1x128xf32>
    %69 = arith.mulf %64, %68 : vector<1x128xf32>
    %cst_33 = arith.constant 1.250000e-01 : f32
    %70 = vector.broadcast %cst_33 : f32 to vector<1x128xf32>
    %71 = arith.mulf %67, %70 : vector<1x128xf32>
    %72 = arith.mulf %69, %69 : vector<1x128xf32>
    %73 = arith.subf %71, %72 : vector<1x128xf32>
    %cst_34 = arith.constant 0.000000e+00 : f32
    %74 = vector.broadcast %cst_34 : f32 to vector<1x128xf32>
    %75 = arith.maximumf %73, %74 : vector<1x128xf32>
    %c0_35 = arith.constant 0 : index
    %c0_36 = arith.constant 0 : index
    %76 = vector.load %arg6[%c0_35, %c0_36] : memref<2x128xf32, #tpu.memory_space<vmem>>, vector<1x128xf32>
    %c1_37 = arith.constant 1 : index
    %c0_38 = arith.constant 0 : index
    %77 = vector.load %arg6[%c1_37, %c0_38] : memref<2x128xf32, #tpu.memory_space<vmem>>, vector<1x128xf32>
    %cst_39 = arith.constant 9.99999974E-6 : f32
    %78 = vector.broadcast %cst_39 : f32 to vector<1x128xf32>
    %79 = arith.addf %75, %78 : vector<1x128xf32>
    %80 = math.rsqrt %79 : vector<1x128xf32>
    %81 = arith.mulf %76, %80 : vector<1x128xf32>
    %82 = arith.mulf %69, %81 : vector<1x128xf32>
    %83 = arith.subf %77, %82 : vector<1x128xf32>
    %84 = vector.broadcast %81 : vector<1x128xf32> to vector<8x128xf32>
    %85 = arith.mulf %62, %84 : vector<8x128xf32>
    %86 = vector.broadcast %83 : vector<1x128xf32> to vector<8x128xf32>
    %87 = arith.addf %85, %86 : vector<8x128xf32>
    %c0_40 = arith.constant 0 : index
    %c0_41 = arith.constant 0 : index
    %88 = vector.load %arg7[%c0_40, %c0_41] : memref<8x128xf32, #tpu.memory_space<vmem>>, vector<8x128xf32>
    tpu.vector_store %arg7[%c0_40, %c0_41], %87 {strides = array<i32>} : memref<8x128xf32, #tpu.memory_space<vmem>>, vector<8x128xf32>,
    return
  }
}

</mosaic_0001>

<llo_original>
// kernel: tpu_custom_call.1
$region0: #{tpu_custom_call.1}
  #allocation0 [shape = 'u32[]', space=smem, size = 0x4, offset = 0x4, fixed_abs, tag = 'smem constant byte address 0x4 - core index']
  #allocation1 [shape = 'u32[144,128]{1,0:T(1,128)}', space=vmem, size = 0x12000, scoped, tag = 'internal scratch']
  %s0 = inlined_call_operand.hbm [shape: bf16[8,128], index: 0, kind: input, shape index: {}]
  %s1 = inlined_call_operand.hbm [shape: bf16[128,128], index: 1, kind: input, shape index: {}]
  %s2 = inlined_call_operand.vmem [shape: f32[2,128], index: 2, kind: input, shape index: {}]
  %s3 = inlined_call_operand.hbm [shape: bf16[128,128], index: 3, kind: input, shape index: {}]
  %s4 = inlined_call_operand.vmem [shape: f32[2,128], index: 4, kind: input, shape index: {}]
  %s5 = inlined_call_operand.hbm [shape: bf16[128,128], index: 5, kind: input, shape index: {}]
  %s6 = inlined_call_operand.vmem [shape: f32[2,128], index: 6, kind: input, shape index: {}]
  %s7 = inlined_call_operand.hbm [shape: f32[8,128], index: 7, kind: output, shape index: {}]
  %s8 = sld [smem:[#allocation0]]
  $region54: #{tpu_custom_call.1} parent=0
    _
  %s10 = ssub.s32 1, %s8
  %s11 = scalar_select 0, %s10, %s8
  $region1: #{tpu_custom_call.1} parent=0
    #allocation2 [shape = 'u8[2048]{0}', space=vmem, size = 0x800, scoped, tag = 'input window, operand 0, single buffered']
    #allocation3 [shape = 's32[1]{0}', space=sflag, size = 0x4, scoped, tag = 'scoped memory for tpu_custom_call.1']
    #allocation4 [shape = 's32[1]{0}', space=sflag, size = 0x4, scoped, tag = 'scoped memory for tpu_custom_call.1']
    #allocation5 [shape = 'u8[32768]{0}', space=vmem, size = 0x8000, scoped, tag = 'input window, operand 1, single buffered']
    #allocation6 [shape = 's32[1]{0}', space=sflag, size = 0x4, scoped, tag = 'scoped memory for tpu_custom_call.1']
    #allocation7 [shape = 'u8[32768]{0}', space=vmem, size = 0x8000, scoped, tag = 'input window, operand 3, single buffered']
    #allocation8 [shape = 'u8[32768]{0}', space=vmem, size = 0x8000, scoped, tag = 'input window, operand 5, single buffered']
    #allocation9 [shape = 's32[1]{0}', space=sflag, size = 0x4, scoped, tag = 'scoped memory for tpu_custom_call.1']
    #allocation10 [shape = 'u8[4096]{0}', space=vmem, size = 0x1000, scoped, tag = 'output window, operand 0, single buffered']
    %12 = vsyncpa [#allocation3], 0
    %13 = vsyncpa [#allocation6], 0
    %14 = vsyncpa [#allocation9], 0
    %15 = vsyncpa [#allocation4], 0
    // Predicated region
    $region2: #{tpu_custom_call.1} parent=1 // pred_check
      _
    $region3: #{tpu_custom_call.1} parent=1 // pred_check_branch
      %17 = sbr.rel (0) target = $region5
    $region4: #{tpu_custom_call.1} parent=1 // pred_region
      %s19 = ssub.s32 64, 64
      %20 = vsyncadd [#allocation3], %s19
      %s22 = sshll.u32 [#allocation2], 4
      %s23 = int_to_ptr.vmem [resolvable:$true] %s22
      %25 = dma.hbm_to_vmem [thread:$0]  %s0, 64, %s23, [#allocation3]
    $region5: #{tpu_custom_call.1} parent=1 // pred_fallthru
      _
    // Predicated region
    $region6: #{tpu_custom_call.1} parent=1 // pred_check
      _
    $region7: #{tpu_custom_call.1} parent=1 // pred_check_branch
      %27 = sbr.rel (0) target = $region9
    $region8: #{tpu_custom_call.1} parent=1 // pred_region
      %s29 = ssub.s32 1024, 1024
      %30 = vsyncadd [#allocation6], %s29
      %s31 = sshll.u32 [#allocation5], 4
      %s32 = int_to_ptr.vmem [resolvable:$true] %s31
      %37 = dma.hbm_to_vmem [thread:$0]  %s1, 1024, %s32, [#allocation6], 64, 64, 4
    $region9: #{tpu_custom_call.1} parent=1 // pred_fallthru
      _
    // Predicated region
    $region10: #{tpu_custom_call.1} parent=1 // pred_check
      _
    $region11: #{tpu_custom_call.1} parent=1 // pred_check_branch
      %39 = sbr.rel (0) target = $region13
    $region12: #{tpu_custom_call.1} parent=1 // pred_region
      _
    $region13: #{tpu_custom_call.1} parent=1 // pred_fallthru
      _
    // Predicated region
    $region14: #{tpu_custom_call.1} parent=1 // pred_check
      _
    $region15: #{tpu_custom_call.1} parent=1 // pred_check_branch
      %41 = sbr.rel (0) target = $region17
    $region16: #{tpu_custom_call.1} parent=1 // pred_region
      %s43 = ssub.s32 1024, 1024
      %44 = vsyncadd [#allocation6], %s43
      %s45 = sshll.u32 [#allocation7], 4
      %s46 = int_to_ptr.vmem [resolvable:$true] %s45
      %51 = dma.hbm_to_vmem [thread:$0]  %s3, 1024, %s46, [#allocation6], 64, 64, 4
    $region17: #{tpu_custom_call.1} parent=1 // pred_fallthru
      _
    // Predicated region
    $region18: #{tpu_custom_call.1} parent=1 // pred_check
      _
    $region19: #{tpu_custom_call.1} parent=1 // pred_check_branch
      %53 = sbr.rel (0) target = $region21
    $region20: #{tpu_custom_call.1} parent=1 // pred_region
      _
    $region21: #{tpu_custom_call.1} parent=1 // pred_fallthru
      _
    // Predicated region
    $region22: #{tpu_custom_call.1} parent=1 // pred_check
      _
    $region23: #{tpu_custom_call.1} parent=1 // pred_check_branch
      %55 = sbr.rel (0) target = $region25
    $region24: #{tpu_custom_call.1} parent=1 // pred_region
      %s57 = ssub.s32 1024, 1024
      %58 = vsyncadd [#allocation9], %s57
      %s59 = sshll.u32 [#allocation8], 4
      %s60 = int_to_ptr.vmem [resolvable:$true] %s59
      %65 = dma.hbm_to_vmem [thread:$0]  %s5, 1024, %s60, [#allocation9], 64, 64, 4
    $region25: #{tpu_custom_call.1} parent=1 // pred_fallthru
      _
    // Predicated region
    $region26: #{tpu_custom_call.1} parent=1 // pred_check
      _
    $region27: #{tpu_custom_call.1} parent=1 // pred_check_branch
      %67 = sbr.rel (0) target = $region29
    $region28: #{tpu_custom_call.1} parent=1 // pred_region
      _
    $region29: #{tpu_custom_call.1} parent=1 // pred_fallthru
      _
    // Predicated region
    $region30: #{tpu_custom_call.1} parent=1 // pred_check
      _
    $region31: #{tpu_custom_call.1} parent=1 // pred_check_branch
      %69 = sbr.rel (0) target = $region33
    $region32: #{tpu_custom_call.1} parent=1 // pred_region
      %70 = dma.done [#allocation3], 64
    $region33: #{tpu_custom_call.1} parent=1 // pred_fallthru
      _
    // Predicated region
    $region34: #{tpu_custom_call.1} parent=1 // pred_check
      _
    $region35: #{tpu_custom_call.1} parent=1 // pred_check_branch
      %72 = sbr.rel (0) target = $region37
    $region36: #{tpu_custom_call.1} parent=1 // pred_region
      %73 = dma.done [#allocation6], 1024
    $region37: #{tpu_custom_call.1} parent=1 // pred_fallthru
      _
    // Predicated region
    $region38: #{tpu_custom_call.1} parent=1 // pred_check
      _
    $region39: #{tpu_custom_call.1} parent=1 // pred_check_branch
      %75 = sbr.rel (0) target = $region41
    $region40: #{tpu_custom_call.1} parent=1 // pred_region
      %76 = dma.done [#allocation6], 1024
    $region41: #{tpu_custom_call.1} parent=1 // pred_fallthru
      _
    // Predicated region
    $region42: #{tpu_custom_call.1} parent=1 // pred_check
      _
    $region43: #{tpu_custom_call.1} parent=1 // pred_check_branch
      %78 = sbr.rel (0) target = $region45
    $region44: #{tpu_custom_call.1} parent=1 // pred_region
      %79 = dma.done [#allocation9], 1024
    $region45: #{tpu_custom_call.1} parent=1 // pred_fallthru
      _
    %v81 = vld [vmem:[#allocation2] sm:$0xf]
    %v82 = vld [vmem:[#allocation5] sm:$0xf]
    %v83 = vld [vmem:[#allocation5 + $0x4] sm:$0xf]
    %v84 = vld [vmem:[#allocation5 + $0x8] sm:$0xf]
    %v85 = vld [vmem:[#allocation5 + $0xc] sm:$0xf]
    %v86 = vld [vmem:[#allocation5 + $0x10] sm:$0xf]
    %v87 = vld [vmem:[#allocation5 + $0x14] sm:$0xf]
    %v88 = vld [vmem:[#allocation5 + $0x18] sm:$0xf]
    %v89 = vld [vmem:[#allocation5 + $0x1c] sm:$0xf]
    %v90 = vld [vmem:[#allocation5 + $0x20] sm:$0xf]
    %v91 = vld [vmem:[#allocation5 + $0x24] sm:$0xf]
    %v92 = vld [vmem:[#allocation5 + $0x28] sm:$0xf]
    %v93 = vld [vmem:[#allocation5 + $0x2c] sm:$0xf]
    %v94 = vld [vmem:[#allocation5 + $0x30] sm:$0xf]
    %v95 = vld [vmem:[#allocation5 + $0x34] sm:$0xf]
    %v96 = vld [vmem:[#allocation5 + $0x38] sm:$0xf]
    %v97 = vld [vmem:[#allocation5 + $0x3c] sm:$0xf]
    %v114 = vunpack.c.l.b16 %v82
    %v115 = vunpack.c.l.b16 %v83
    %v116 = vunpack.c.l.b16 %v84
    %v117 = vunpack.c.l.b16 %v85
    %v118 = vunpack.c.l.b16 %v86
    %v119 = vunpack.c.l.b16 %v87
    %v120 = vunpack.c.l.b16 %v88
    %v121 = vunpack.c.l.b16 %v89
    %v122 = vunpack.c.l.b16 %v90
    %v123 = vunpack.c.l.b16 %v91
    %v124 = vunpack.c.l.b16 %v92
    %v125 = vunpack.c.l.b16 %v93
    %v126 = vunpack.c.l.b16 %v94
    %v127 = vunpack.c.l.b16 %v95
    %v128 = vunpack.c.l.b16 %v96
    %v129 = vunpack.c.l.b16 %v97
    %v130 = vpack.c.b16 %v115, %v114
    %v131 = vpack.c.b16 %v117, %v116
    %v132 = vpack.c.b16 %v119, %v118
    %v133 = vpack.c.b16 %v121, %v120
    %v134 = vpack.c.b16 %v123, %v122
    %v135 = vpack.c.b16 %v125, %v124
    %v136 = vpack.c.b16 %v127, %v126
    %v137 = vpack.c.b16 %v129, %v128
    %146 = vmatprep.subr.bf16.mxu0 0
    %147 = vmatpush1.bf16.msra.mxu0 %v137
    %148 = vmatprep.subr.bf16.mxu0 0
    %149 = vmatpush1.bf16.msra.mxu0 %v136
    %150 = vmatprep.subr.bf16.mxu0 0
    %151 = vmatpush1.bf16.msra.mxu0 %v135
    %152 = vmatprep.subr.bf16.mxu0 0
    %153 = vmatpush1.bf16.msra.mxu0 %v134
    %154 = vmatprep.subr.bf16.mxu0 0
    %155 = vmatpush1.bf16.msra.mxu0 %v133
    %156 = vmatprep.subr.bf16.mxu0 0
    %157 = vmatpush1.bf16.msra.mxu0 %v132
    %158 = vmatprep.subr.bf16.mxu0 0
    %159 = vmatpush1.bf16.msra.mxu0 %v131
    %160 = vmatprep.subr.bf16.mxu0 0
    %161 = vmatpush1.bf16.msra.mxu0 %v130
    %162 = vmatprep.subr.bf16.mxu0 0
    %163 = vmatpush2.bf16.msra.mxu0 0
    %164 = vmatprep.subr.bf16.mxu0 0
    %165 = vmatpush2.bf16.msra.mxu0 0
    %166 = vmatprep.subr.bf16.mxu0 0
    %167 = vmatpush2.bf16.msra.mxu0 0
    %168 = vmatprep.subr.bf16.mxu0 0
    %169 = vmatpush2.bf16.msra.mxu0 0
    %170 = vmatprep.subr.bf16.mxu0 0
    %171 = vmatpush2.bf16.msra.mxu0 0
    %172 = vmatprep.subr.bf16.mxu0 0
    %173 = vmatpush2.bf16.msra.mxu0 0
    %174 = vmatprep.subr.bf16.mxu0 0
    %175 = vmatpush2.bf16.msra.mxu0 0
    %176 = vmatprep.subr.bf16.mxu0 0
    %177 = vmatpush2.bf16.msra.mxu0 0
    %178 = vmatprep.mubr.bf16.mxu0 0
    %179 = vmatmul.mubr.bf16.gmra.mxu0 %v81
    %v180 = vpop.f32.mrf.mxu0
    %v181 = vadd.f32 0.0, %v180
    %v182 = vpop.f32.mrf.mxu0
    %v183 = vpop.f32.mrf.mxu0
    %v184 = vpop.f32.mrf.mxu0
    %185 = vdwg.mxu0
    %v186 = vrot.slane %v181, 4
    %v187 = vadd.f32 %v181, %v186
    %v188 = vrot.slane %v187, 2
    %v189 = vadd.f32 %v187, %v188
    %v190 = vrot.slane %v189, 1
    %v191 = vadd.f32 %v189, %v190
    %v192 = vmul.f32 %v181, %v181
    %v193 = vrot.slane %v192, 4
    %v194 = vadd.f32 %v192, %v193
    %v195 = vrot.slane %v194, 2
    %v196 = vadd.f32 %v194, %v195
    %v197 = vrot.slane %v196, 1
    %v198 = vadd.f32 %v196, %v197
    %v199 = vmul.f32 %v191, 0.125
    %v200 = vmul.f32 %v198, 0.125
    %v201 = vmul.f32 %v199, %v199
    %v202 = vsub.f32 %v200, %v201
    %v203 = vmax.f32 %v202, 0.0
    %v204 = vld [vmem:[%s2] sm:$0x1]
    %v205 = vld [vmem:[%s2 + $0x1] sm:$0x1]
    %v206 = vadd.f32 %v203, 1e-05
    %v207 = vrsqrt.pop %v206
    %v208 = vmul.f32 %v204, %v207
    %v209 = vmul.f32 %v199, %v208
    %v210 = vsub.f32 %v205, %v209
    %v211 = vlaneseq
    %v212 = vshrl.u32 %v211, 7
    %v213 = vsub.s32 0, %v212
    %v214 = vrot.slane %v208, %v213
    %v215 = vmul.f32 %v181, %v214
    %v216 = vlaneseq
    %v217 = vshrl.u32 %v216, 7
    %v218 = vsub.s32 0, %v217
    %v219 = vrot.slane %v210, %v218
    %v220 = vadd.f32 %v215, %v219
    %v221 = vmax.f32 %v220, 0.0
    %v222 = vpack.c.bf16 %v221, %v221
    %v223 = vld [vmem:[#allocation7] sm:$0xf]
    %v224 = vld [vmem:[#allocation7 + $0x4] sm:$0xf]
    %v225 = vld [vmem:[#allocation7 + $0x8] sm:$0xf]
    %v226 = vld [vmem:[#allocation7 + $0xc] sm:$0xf]
    %v227 = vld [vmem:[#allocation7 + $0x10] sm:$0xf]
    %v228 = vld [vmem:[#allocation7 + $0x14] sm:$0xf]
    %v229 = vld [vmem:[#allocation7 + $0x18] sm:$0xf]
    %v230 = vld [vmem:[#allocation7 + $0x1c] sm:$0xf]
    %v231 = vld [vmem:[#allocation7 + $0x20] sm:$0xf]
    %v232 = vld [vmem:[#allocation7 + $0x24] sm:$0xf]
    %v233 = vld [vmem:[#allocation7 + $0x28] sm:$0xf]
    %v234 = vld [vmem:[#allocation7 + $0x2c] sm:$0xf]
    %v235 = vld [vmem:[#allocation7 + $0x30] sm:$0xf]
    %v236 = vld [vmem:[#allocation7 + $0x34] sm:$0xf]
    %v237 = vld [vmem:[#allocation7 + $0x38] sm:$0xf]
    %v238 = vld [vmem:[#allocation7 + $0x3c] sm:$0xf]
    %v255 = vunpack.c.l.b16 %v223
    %v256 = vunpack.c.l.b16 %v224
    %v257 = vunpack.c.l.b16 %v225
    %v258 = vunpack.c.l.b16 %v226
    %v259 = vunpack.c.l.b16 %v227
    %v260 = vunpack.c.l.b16 %v228
    %v261 = vunpack.c.l.b16 %v229
    %v262 = vunpack.c.l.b16 %v230
    %v263 = vunpack.c.l.b16 %v231
    %v264 = vunpack.c.l.b16 %v232
    %v265 = vunpack.c.l.b16 %v233
    %v266 = vunpack.c.l.b16 %v234
    %v267 = vunpack.c.l.b16 %v235
    %v268 = vunpack.c.l.b16 %v236
    %v269 = vunpack.c.l.b16 %v237
    %v270 = vunpack.c.l.b16 %v238
    %v271 = vpack.c.b16 %v256, %v255
    %v272 = vpack.c.b16 %v258, %v257
    %v273 = vpack.c.b16 %v260, %v259
    %v274 = vpack.c.b16 %v262, %v261
    %v275 = vpack.c.b16 %v264, %v263
    %v276 = vpack.c.b16 %v266, %v265
    %v277 = vpack.c.b16 %v268, %v267
    %v278 = vpack.c.b16 %v270, %v269
    %287 = vmatprep.subr.bf16.mxu0 0
    %288 = vmatpush1.bf16.msra.mxu0 %v278
    %289 = vmatprep.subr.bf16.mxu0 0
    %290 = vmatpush1.bf16.msra.mxu0 %v277
    %291 = vmatprep.subr.bf16.mxu0 0
    %292 = vmatpush1.bf16.msra.mxu0 %v276
    %293 = vmatprep.subr.bf16.mxu0 0
    %294 = vmatpush1.bf16.msra.mxu0 %v275
    %295 = vmatprep.subr.bf16.mxu0 0
    %296 = vmatpush1.bf16.msra.mxu0 %v274
    %297 = vmatprep.subr.bf16.mxu0 0
    %298 = vmatpush1.bf16.msra.mxu0 %v273
    %299 = vmatprep.subr.bf16.mxu0 0
    %300 = vmatpush1.bf16.msra.mxu0 %v272
    %301 = vmatprep.subr.bf16.mxu0 0
    %302 = vmatpush1.bf16.msra.mxu0 %v271
    %303 = vmatprep.subr.bf16.mxu0 0
    %304 = vmatpush2.bf16.msra.mxu0 0
    %305 = vmatprep.subr.bf16.mxu0 0
    %306 = vmatpush2.bf16.msra.mxu0 0
    %307 = vmatprep.subr.bf16.mxu0 0
    %308 = vmatpush2.bf16.msra.mxu0 0
    %309 = vmatprep.subr.bf16.mxu0 0
    %310 = vmatpush2.bf16.msra.mxu0 0
    %311 = vmatprep.subr.bf16.mxu0 0
    %312 = vmatpush2.bf16.msra.mxu0 0
    %313 = vmatprep.subr.bf16.mxu0 0
    %314 = vmatpush2.bf16.msra.mxu0 0
    %315 = vmatprep.subr.bf16.mxu0 0
    %316 = vmatpush2.bf16.msra.mxu0 0
    %317 = vmatprep.subr.bf16.mxu0 0
    %318 = vmatpush2.bf16.msra.mxu0 0
    %319 = vmatprep.mubr.bf16.mxu0 0
    %320 = vmatmul.mubr.bf16.gmra.mxu0 %v222
    %v321 = vpop.f32.mrf.mxu0
    %v322 = vadd.f32 0.0, %v321
    %v323 = vpop.f32.mrf.mxu0
    %v324 = vpop.f32.mrf.mxu0
    %v325 = vpop.f32.mrf.mxu0
    %326 = vdwg.mxu0
    %v327 = vrot.slane %v322, 4
    %v328 = vadd.f32 %v322, %v327
    %v329 = vrot.slane %v328, 2
    %v330 = vadd.f32 %v328, %v329
    %v331 = vrot.slane %v330, 1
    %v332 = vadd.f32 %v330, %v331
    %v333 = vmul.f32 %v322, %v322
    %v334 = vrot.slane %v333, 4
    %v335 = vadd.f32 %v333, %v334
    %v336 = vrot.slane %v335, 2
    %v337 = vadd.f32 %v335, %v336
    %v338 = vrot.slane %v337, 1
    %v339 = vadd.f32 %v337, %v338
    %v340 = vmul.f32 %v332, 0.125
    %v341 = vmul.f32 %v339, 0.125
    %v342 = vmul.f32 %v340, %v340
    %v343 = vsub.f32 %v341, %v342
    %v344 = vmax.f32 %v343, 0.0
    %v345 = vld [vmem:[%s4] sm:$0x1]
    %v346 = vld [vmem:[%s4 + $0x1] sm:$0x1]
    %v347 = vadd.f32 %v344, 1e-05
    %v348 = vrsqrt.pop %v347
    %v349 = vmul.f32 %v345, %v348
    %v350 = vmul.f32 %v340, %v349
    %v351 = vsub.f32 %v346, %v350
    %v352 = vlaneseq
    %v353 = vshrl.u32 %v352, 7
    %v354 = vsub.s32 0, %v353
    %v355 = vrot.slane %v349, %v354
    %v356 = vmul.f32 %v322, %v355
    %v357 = vlaneseq
    %v358 = vshrl.u32 %v357, 7
    %v359 = vsub.s32 0, %v358
    %v360 = vrot.slane %v351, %v359
    %v361 = vadd.f32 %v356, %v360
    %v362 = vmax.f32 %v361, 0.0
    %v363 = vpack.c.bf16 %v362, %v362
    %v364 = vld [vmem:[#allocation8] sm:$0xf]
    %v365 = vld [vmem:[#allocation8 + $0x4] sm:$0xf]
    %v366 = vld [vmem:[#allocation8 + $0x8] sm:$0xf]
    %v367 = vld [vmem:[#allocation8 + $0xc] sm:$0xf]
    %v368 = vld [vmem:[#allocation8 + $0x10] sm:$0xf]
    %v369 = vld [vmem:[#allocation8 + $0x14] sm:$0xf]
    %v370 = vld [vmem:[#allocation8 + $0x18] sm:$0xf]
    %v371 = vld [vmem:[#allocation8 + $0x1c] sm:$0xf]
    %v372 = vld [vmem:[#allocation8 + $0x20] sm:$0xf]
    %v373 = vld [vmem:[#allocation8 + $0x24] sm:$0xf]
    %v374 = vld [vmem:[#allocation8 + $0x28] sm:$0xf]
    %v375 = vld [vmem:[#allocation8 + $0x2c] sm:$0xf]
    %v376 = vld [vmem:[#allocation8 + $0x30] sm:$0xf]
    %v377 = vld [vmem:[#allocation8 + $0x34] sm:$0xf]
    %v378 = vld [vmem:[#allocation8 + $0x38] sm:$0xf]
    %v379 = vld [vmem:[#allocation8 + $0x3c] sm:$0xf]
    %v396 = vunpack.c.l.b16 %v364
    %v397 = vunpack.c.l.b16 %v365
    %v398 = vunpack.c.l.b16 %v366
    %v399 = vunpack.c.l.b16 %v367
    %v400 = vunpack.c.l.b16 %v368
    %v401 = vunpack.c.l.b16 %v369
    %v402 = vunpack.c.l.b16 %v370
    %v403 = vunpack.c.l.b16 %v371
    %v404 = vunpack.c.l.b16 %v372
    %v405 = vunpack.c.l.b16 %v373
    %v406 = vunpack.c.l.b16 %v374
    %v407 = vunpack.c.l.b16 %v375
    %v408 = vunpack.c.l.b16 %v376
    %v409 = vunpack.c.l.b16 %v377
    %v410 = vunpack.c.l.b16 %v378
    %v411 = vunpack.c.l.b16 %v379
    %v412 = vpack.c.b16 %v397, %v396
    %v413 = vpack.c.b16 %v399, %v398
    %v414 = vpack.c.b16 %v401, %v400
    %v415 = vpack.c.b16 %v403, %v402
    %v416 = vpack.c.b16 %v405, %v404
    %v417 = vpack.c.b16 %v407, %v406
    %v418 = vpack.c.b16 %v409, %v408
    %v419 = vpack.c.b16 %v411, %v410
    %428 = vmatprep.subr.bf16.mxu0 0
    %429 = vmatpush1.bf16.msra.mxu0 %v419
    %430 = vmatprep.subr.bf16.mxu0 0
    %431 = vmatpush1.bf16.msra.mxu0 %v418
    %432 = vmatprep.subr.bf16.mxu0 0
    %433 = vmatpush1.bf16.msra.mxu0 %v417
    %434 = vmatprep.subr.bf16.mxu0 0
    %435 = vmatpush1.bf16.msra.mxu0 %v416
    %436 = vmatprep.subr.bf16.mxu0 0
    %437 = vmatpush1.bf16.msra.mxu0 %v415
    %438 = vmatprep.subr.bf16.mxu0 0
    %439 = vmatpush1.bf16.msra.mxu0 %v414
    %440 = vmatprep.subr.bf16.mxu0 0
    %441 = vmatpush1.bf16.msra.mxu0 %v413
    %442 = vmatprep.subr.bf16.mxu0 0
    %443 = vmatpush1.bf16.msra.mxu0 %v412
    %444 = vmatprep.subr.bf16.mxu0 0
    %445 = vmatpush2.bf16.msra.mxu0 0
    %446 = vmatprep.subr.bf16.mxu0 0
    %447 = vmatpush2.bf16.msra.mxu0 0
    %448 = vmatprep.subr.bf16.mxu0 0
    %449 = vmatpush2.bf16.msra.mxu0 0
    %450 = vmatprep.subr.bf16.mxu0 0
    %451 = vmatpush2.bf16.msra.mxu0 0
    %452 = vmatprep.subr.bf16.mxu0 0
    %453 = vmatpush2.bf16.msra.mxu0 0
    %454 = vmatprep.subr.bf16.mxu0 0
    %455 = vmatpush2.bf16.msra.mxu0 0
    %456 = vmatprep.subr.bf16.mxu0 0
    %457 = vmatpush2.bf16.msra.mxu0 0
    %458 = vmatprep.subr.bf16.mxu0 0
    %459 = vmatpush2.bf16.msra.mxu0 0
    %460 = vmatprep.mubr.bf16.mxu0 0
    %461 = vmatmul.mubr.bf16.gmra.mxu0 %v363
    %v462 = vpop.f32.mrf.mxu0
    %v463 = vadd.f32 0.0, %v462
    %v464 = vpop.f32.mrf.mxu0
    %v465 = vpop.f32.mrf.mxu0
    %v466 = vpop.f32.mrf.mxu0
    %467 = vdwg.mxu0
    %v468 = vrot.slane %v463, 4
    %v469 = vadd.f32 %v463, %v468
    %v470 = vrot.slane %v469, 2
    %v471 = vadd.f32 %v469, %v470
    %v472 = vrot.slane %v471, 1
    %v473 = vadd.f32 %v471, %v472
    %v474 = vmul.f32 %v463, %v463
    %v475 = vrot.slane %v474, 4
    %v476 = vadd.f32 %v474, %v475
    %v477 = vrot.slane %v476, 2
    %v478 = vadd.f32 %v476, %v477
    %v479 = vrot.slane %v478, 1
    %v480 = vadd.f32 %v478, %v479
    %v481 = vmul.f32 %v473, 0.125
    %v482 = vmul.f32 %v480, 0.125
    %v483 = vmul.f32 %v481, %v481
    %v484 = vsub.f32 %v482, %v483
    %v485 = vmax.f32 %v484, 0.0
    %v486 = vld [vmem:[%s6] sm:$0x1]
    %v487 = vld [vmem:[%s6 + $0x1] sm:$0x1]
    %v488 = vadd.f32 %v485, 1e-05
    %v489 = vrsqrt.pop %v488
    %v490 = vmul.f32 %v486, %v489
    %v491 = vmul.f32 %v481, %v490
    %v492 = vsub.f32 %v487, %v491
    %v493 = vlaneseq
    %v494 = vshrl.u32 %v493, 7
    %v495 = vsub.s32 0, %v494
    %v496 = vrot.slane %v490, %v495
    %v497 = vmul.f32 %v463, %v496
    %v498 = vlaneseq
    %v499 = vshrl.u32 %v498, 7
    %v500 = vsub.s32 0, %v499
    %v501 = vrot.slane %v492, %v500
    %v502 = vadd.f32 %v497, %v501
    %503 = vst [vmem:[#allocation10] sm:$0xff] %v502
    // Predicated region
    $region46: #{tpu_custom_call.1} parent=1 // pred_check
      _
    $region47: #{tpu_custom_call.1} parent=1 // pred_check_branch
      %505 = sbr.rel (0) target = $region49
    $region48: #{tpu_custom_call.1} parent=1 // pred_region
      %s507 = ssub.s32 128, 128
      %508 = vsyncadd [#allocation4], %s507
      %s510 = sshll.u32 [#allocation10], 4
      %s511 = int_to_ptr.vmem [resolvable:$true] %s510
      %513 = dma.vmem_to_hbm [thread:$0]  %s511, 128, %s7, [#allocation4]
    $region49: #{tpu_custom_call.1} parent=1 // pred_fallthru
      _
    // Predicated region
    $region50: #{tpu_custom_call.1} parent=1 // pred_check
      _
    $region51: #{tpu_custom_call.1} parent=1 // pred_check_branch
      %515 = sbr.rel (0) target = $region53
    $region52: #{tpu_custom_call.1} parent=1 // pred_region
      %516 = dma.done [#allocation4], 128
    $region53: #{tpu_custom_call.1} parent=1 // pred_fallthru
      _
    %517 = vsyncpa [#allocation3], 1
    %518 = vsyncpa [#allocation6], 1
    %519 = vsyncpa [#allocation9], 1
    %520 = vsyncpa [#allocation4], 1

</llo_original>
